<compile_context>
chip_gen: v7x
topology: tpu7x:2x2x1
jax: 0.10.0
libtpu: 0.0.40
codegen_flags: <defaults>
</compile_context>

<pallas_src>
import jax
import jax.numpy as jnp
from jax.experimental import pallas as pl
from jax.experimental.pallas import tpu as pltpu


def _ceil_div(a, b):
    return -(-a // b)


def _round_up(n, m):
    return _ceil_div(n, m) * m


def actor_kernel(x_ref, w1_ref, b1_ref, w2_ref, b2_ref, w3_ref, b3_ref, out_ref):
    """Fused MLP + softmax, computed feature-major: activations are
    (features, batch) so the batch dimension sits on the 128-wide lane axis.
    All math is f32 (feature dims of 16/32/8 make narrower MXU operands
    pointless)."""
    x = x_ref[...]                                                   # (S, tb)

    # fc1 + ReLU
    h1 = jnp.dot(w1_ref[...], x, preferred_element_type=jnp.float32) + b1_ref[...]
    h1 = jnp.maximum(h1, 0.0)                                        # (H, tb)

    # fc2 + ReLU
    h2 = jnp.dot(w2_ref[...], h1, preferred_element_type=jnp.float32) + b2_ref[...]
    h2 = jnp.maximum(h2, 0.0)                                        # (H, tb)

    # fc3
    logits = (jnp.dot(w3_ref[...], h2, preferred_element_type=jnp.float32)
              + b3_ref[...])                                         # (A, tb)

    # Numerically-stable softmax over the action (sublane) axis. Each batch
    # element is one lane column -> garbage columns in a ragged last tile
    # cannot contaminate valid columns.
    m = jnp.max(logits, axis=0, keepdims=True)                       # (1, tb)
    e = jnp.exp(logits - m)                                          # EUP, full lanes
    denom = jnp.sum(e, axis=0, keepdims=True)                        # (1, tb), >= 1 (max row is exp(0))
    inv = pl.reciprocal(denom, approx=True)                          # EUP approx 1/x
    inv = inv * (2.0 - denom * inv)                                  # one Newton step -> f32-accurate
    out_ref[...] = (e * inv).astype(out_ref.dtype)                   # (A, tb) lane-dense store


def _cost_estimate(B, S, H, A):
    matmul_flops = 2 * B * (S * H + H * H + H * A)
    elementwise_flops = B * (4 * H + 6 * A)        # bias adds, ReLUs, softmax arithmetic
    transcendentals = B * (A + 1)                  # exp + reciprocal
    bytes_accessed = 4 * (B * S + H * S + H + H * H + H + A * H + A + B * A)
    return pl.CostEstimate(flops=matmul_flops + elementwise_flops,
                           transcendentals=transcendentals,
                           bytes_accessed=bytes_accessed)


def actor_forward(state, w1, b1, w2, b2, w3, b3, *, tb=None):
    """Forward pass of the Actor MLP; returns softmax action probabilities.

    `state` is (batch, state_dim); output is (batch, action_dim) — same
    contract as the PyTorch module. Weights are (out_features, in_features),
    biases are (out_features, 1) columns.
    """
    B, S = state.shape
    H = w1.shape[0]
    A = w3.shape[0]

    # Feature-major presentation: (state_dim, batch) in, (action_dim, batch)
    # out of the kernel. These transposes are cheap layout plumbing and are
    # what lets every matmul put the batch on the MXU N/lane axis.
    x_fm = state.T                                                   # (S, B)

    cost = _cost_estimate(B, S, H, A)

    # Tile selection:
    #  * Small batch: gridless call (whole problem resident in VMEM, zero
    #    grid/pipeline overhead — the common PPO action-selection case).
    #  * Larger batch: 1-D grid over batch; tile is a multiple of 128 lanes,
    #    capped at 2048, and at most ceil(B/2) so >= 2 tiles exist and both
    #    v7x TensorCores get work. VMEM per tile is < 1 MiB at tb=2048.
    if tb is None:
        tb = B if B <= 512 else min(2048, _round_up(_ceil_div(B, 2), 128))
    if tb < B:
        tb = _round_up(tb, 128)            # lane-dim block size must be 128-aligned
    gridless = tb >= B

    if gridless:
        out_fm = pl.pallas_call(
            actor_kernel,
            out_shape=jax.ShapeDtypeStruct((A, B), jnp.float32),
            in_specs=[pl.BlockSpec(memory_space=pltpu.MemorySpace.VMEM)] * 7,
            out_specs=pl.BlockSpec(memory_space=pltpu.MemorySpace.VMEM),
            cost_estimate=cost,
        )(x_fm, w1, b1, w2, b2, w3, b3)
        return out_fm.T

    # Grid path. No pad / slice: Pallas handles the ragged last tile (OOB
    # reads stay column-local, OOB writes are dropped).
    num_tiles = pl.cdiv(B, tb)
    out_fm = pl.pallas_call(
        actor_kernel,
        out_shape=jax.ShapeDtypeStruct((A, B), jnp.float32),
        grid=(num_tiles,),
        in_specs=[
            pl.BlockSpec((S, tb), lambda i: (0, i)),   # state tile (feature-major)
            pl.BlockSpec((H, S), lambda i: (0, 0)),    # W1 (out, in)
            pl.BlockSpec((H, 1), lambda i: (0, 0)),    # b1 (out, 1)
            pl.BlockSpec((H, H), lambda i: (0, 0)),    # W2
            pl.BlockSpec((H, 1), lambda i: (0, 0)),    # b2
            pl.BlockSpec((A, H), lambda i: (0, 0)),    # W3
            pl.BlockSpec((A, 1), lambda i: (0, 0)),    # b3
        ],
        out_specs=pl.BlockSpec((A, tb), lambda i: (0, i)),
        compiler_params=pltpu.CompilerParams(
            dimension_semantics=("parallel",)),        # megacore sharding on v7x
        cost_estimate=cost,
    )(x_fm, w1, b1, w2, b2, w3, b3)
    return out_fm.T


def init_linear(key, in_features, out_features):
    """PyTorch nn.Linear default init: U(-1/sqrt(in), 1/sqrt(in)).
    Weight is (out, in) (PyTorch layout); bias is an (out, 1) column so the
    feature-major kernel broadcasts it across the batch (lane) axis."""
    kw, kb = jax.random.split(key)
    bound = 1.0 / jnp.sqrt(jnp.float32(in_features))
    w = jax.random.uniform(kw, (out_features, in_features), jnp.float32, -bound, bound)
    b = jax.random.uniform(kb, (out_features, 1), jnp.float32, -bound, bound)
    return w, b


def reference_forward(x, w1, b1, w2, b2, w3, b3):
    h1 = jnp.maximum(x @ w1.T + b1[:, 0], 0.0)
    h2 = jnp.maximum(h1 @ w2.T + b2[:, 0], 0.0)
    logits = h2 @ w3.T + b3[:, 0]
    return jax.nn.softmax(logits, axis=-1)


if __name__ == "__main__":
    # Shapes consistent with the module: state (B, state_dim), hidden 32,
    # action_dim 8.
    state_dim, hidden_size, action_dim = 16, 32, 8

    key = jax.random.PRNGKey(0)
    k_x, k1, k2, k3, k_big = jax.random.split(key, 5)

    w1, b1 = init_linear(k1, state_dim, hidden_size)
    w2, b2 = init_linear(k2, hidden_size, hidden_size)
    w3, b3 = init_linear(k3, hidden_size, action_dim)

    # ---- Small batch: gridless path ----
    batch = 8
    x = jax.random.normal(k_x, (batch, state_dim), jnp.float32)
    probs = actor_forward(x, w1, b1, w2, b2, w3, b3)
    probs = jax.block_until_ready(probs)
    ref = reference_forward(x, w1, b1, w2, b2, w3, b3)
    assert probs.shape == (batch, action_dim)
    assert jnp.allclose(probs, ref, atol=1e-5, rtol=1e-5)
    assert jnp.allclose(jnp.sum(probs, axis=-1), jnp.ones((batch,)), atol=1e-5)

    # ---- Larger batch: grid path (>=2 tiles for v7x) + ragged last tile ----
    big_batch = 1040   # not a multiple of the tile -> exercises ragged handling
    x_big = jax.random.normal(k_big, (big_batch, state_dim), jnp.float32)
    probs_big = actor_forward(x_big, w1, b1, w2, b2, w3, b3)
    probs_big = jax.block_until_ready(probs_big)
    ref_big = reference_forward(x_big, w1, b1, w2, b2, w3, b3)
    assert probs_big.shape == (big_batch, action_dim)
    assert jnp.allclose(probs_big, ref_big, atol=1e-5, rtol=1e-5)
    assert jnp.allclose(jnp.sum(probs_big, axis=-1),
                        jnp.ones((big_batch,)), atol=1e-5)

    print("KERNEL_OK")
</pallas_src>

<mosaic_0001>
module attributes {stable_mosaic.version = 11 : i64} {
  func.func @actor_kernel(%arg0: memref<16x8xf32, #tpu.memory_space<vmem>>, %arg1: memref<32x16xf32, #tpu.memory_space<vmem>>, %arg2: memref<32x1xf32, #tpu.memory_space<vmem>>, %arg3: memref<32x32xf32, #tpu.memory_space<vmem>>, %arg4: memref<32x1xf32, #tpu.memory_space<vmem>>, %arg5: memref<8x32xf32, #tpu.memory_space<vmem>>, %arg6: memref<8x1xf32, #tpu.memory_space<vmem>>, %arg7: memref<8x8xf32, #tpu.memory_space<vmem>>) attributes {dimension_semantics = [], scalar_prefetch = 0 : i64, scratch_operands = 0 : i64, tpu.core_type = #tpu.core_type<tc>} {
    %c0 = arith.constant 0 : index
    %c0_0 = arith.constant 0 : index
    %0 = vector.load %arg0[%c0, %c0_0] : memref<16x8xf32, #tpu.memory_space<vmem>>, vector<16x8xf32>
    %c0_1 = arith.constant 0 : index
    %c0_2 = arith.constant 0 : index
    %1 = vector.load %arg1[%c0_1, %c0_2] : memref<32x16xf32, #tpu.memory_space<vmem>>, vector<32x16xf32>
    %cst = arith.constant dense<0.000000e+00> : vector<32x8xf32>
    %2 = tpu.matmul %1, %0, %cst {dimension_numbers = #tpu.dot_dimension_numbers<[1], [0], [0], [1], [0, 0, 1, 1], [], []>} : vector<32x16xf32>, vector<16x8xf32>, vector<32x8xf32> -> vector<32x8xf32>
    %c0_3 = arith.constant 0 : index
    %c0_4 = arith.constant 0 : index
    %3 = vector.load %arg2[%c0_3, %c0_4] : memref<32x1xf32, #tpu.memory_space<vmem>>, vector<32x1xf32>
    %4 = vector.broadcast %3 : vector<32x1xf32> to vector<32x8xf32>
    %5 = arith.addf %2, %4 : vector<32x8xf32>
    %cst_5 = arith.constant 0.000000e+00 : f32
    %6 = vector.broadcast %cst_5 : f32 to vector<32x8xf32>
    %7 = arith.maximumf %5, %6 : vector<32x8xf32>
    %c0_6 = arith.constant 0 : index
    %c0_7 = arith.constant 0 : index
    %8 = vector.load %arg3[%c0_6, %c0_7] : memref<32x32xf32, #tpu.memory_space<vmem>>, vector<32x32xf32>
    %cst_8 = arith.constant dense<0.000000e+00> : vector<32x8xf32>
    %9 = tpu.matmul %8, %7, %cst_8 {dimension_numbers = #tpu.dot_dimension_numbers<[1], [0], [0], [1], [0, 0, 1, 1], [], []>} : vector<32x32xf32>, vector<32x8xf32>, vector<32x8xf32> -> vector<32x8xf32>
    %c0_9 = arith.constant 0 : index
    %c0_10 = arith.constant 0 : index
    %10 = vector.load %arg4[%c0_9, %c0_10] : memref<32x1xf32, #tpu.memory_space<vmem>>, vector<32x1xf32>
    %11 = vector.broadcast %10 : vector<32x1xf32> to vector<32x8xf32>
    %12 = arith.addf %9, %11 : vector<32x8xf32>
    %cst_11 = arith.constant 0.000000e+00 : f32
    %13 = vector.broadcast %cst_11 : f32 to vector<32x8xf32>
    %14 = arith.maximumf %12, %13 : vector<32x8xf32>
    %c0_12 = arith.constant 0 : index
    %c0_13 = arith.constant 0 : index
    %15 = vector.load %arg5[%c0_12, %c0_13] : memref<8x32xf32, #tpu.memory_space<vmem>>, vector<8x32xf32>
    %cst_14 = arith.constant dense<0.000000e+00> : vector<8x8xf32>
    %16 = tpu.matmul %15, %14, %cst_14 {dimension_numbers = #tpu.dot_dimension_numbers<[1], [0], [0], [1], [0, 0, 1, 1], [], []>} : vector<8x32xf32>, vector<32x8xf32>, vector<8x8xf32> -> vector<8x8xf32>
    %c0_15 = arith.constant 0 : index
    %c0_16 = arith.constant 0 : index
    %17 = vector.load %arg6[%c0_15, %c0_16] : memref<8x1xf32, #tpu.memory_space<vmem>>, vector<8x1xf32>
    %18 = vector.broadcast %17 : vector<8x1xf32> to vector<8x8xf32>
    %19 = arith.addf %16, %18 : vector<8x8xf32>
    %cst_17 = arith.constant dense<0xFF800000> : vector<8xf32>
    %20 = vector.multi_reduction <maximumf>, %19, %cst_17 [0] : vector<8x8xf32> to vector<8xf32>
    %21 = vector.shape_cast %20 : vector<8xf32> to vector<1x8xf32>
    %22 = vector.broadcast %21 : vector<1x8xf32> to vector<8x8xf32>
    %23 = arith.subf %19, %22 : vector<8x8xf32>
    %24 = math.exp %23 : vector<8x8xf32>
    %cst_18 = arith.constant dense<0.000000e+00> : vector<8xf32>
    %25 = vector.multi_reduction <add>, %24, %cst_18 [0] : vector<8x8xf32> to vector<8xf32>
    %26 = vector.shape_cast %25 : vector<8xf32> to vector<1x8xf32>
    %27 = tpu.reciprocal %26 {approx = true} : vector<1x8xf32> -> vector<1x8xf32>
    %28 = arith.mulf %26, %27 : vector<1x8xf32>
    %cst_19 = arith.constant 2.000000e+00 : f32
    %29 = vector.broadcast %cst_19 : f32 to vector<1x8xf32>
    %30 = arith.subf %29, %28 : vector<1x8xf32>
    %31 = arith.mulf %27, %30 : vector<1x8xf32>
    %32 = vector.broadcast %31 : vector<1x8xf32> to vector<8x8xf32>
    %33 = arith.mulf %24, %32 : vector<8x8xf32>
    %c0_20 = arith.constant 0 : index
    %c0_21 = arith.constant 0 : index
    %34 = vector.load %arg7[%c0_20, %c0_21] : memref<8x8xf32, #tpu.memory_space<vmem>>, vector<8x8xf32>
    tpu.vector_store %arg7[%c0_20, %c0_21], %33 {strides = array<i32>} : memref<8x8xf32, #tpu.memory_space<vmem>>, vector<8x8xf32>,
    return
  }
}

</mosaic_0001>

<llo_original>
// kernel: tpu_custom_call.1
$region0: #{tpu_custom_call.1}
  #allocation0 [shape = 'u32[]', space=smem, size = 0x4, offset = 0x4, fixed_abs, tag = 'smem constant byte address 0x4 - core index']
  #allocation1 [shape = 'u32[144,128]{1,0:T(1,128)}', space=vmem, size = 0x12000, scoped, tag = 'internal scratch']
  %s0 = inlined_call_operand.vmem [shape: f32[16,8], index: 0, kind: input, shape index: {}]
  %s1 = inlined_call_operand.vmem [shape: f32[32,16], index: 1, kind: input, shape index: {}]
  %s2 = inlined_call_operand.vmem [shape: f32[32,1], index: 2, kind: input, shape index: {}]
  %s3 = inlined_call_operand.vmem [shape: f32[32,32], index: 3, kind: input, shape index: {}]
  %s4 = inlined_call_operand.vmem [shape: f32[32,1], index: 4, kind: input, shape index: {}]
  %s5 = inlined_call_operand.vmem [shape: f32[8,32], index: 5, kind: input, shape index: {}]
  %s6 = inlined_call_operand.vmem [shape: f32[8,1], index: 6, kind: input, shape index: {}]
  %s7 = inlined_call_operand.hbm [shape: f32[8,8], index: 7, kind: output, shape index: {}]
  %s8 = sld [smem:[#allocation0]]
  $region38: #{tpu_custom_call.1} parent=0
    _
  %s10 = ssub.s32 1, %s8
  %s11 = scalar_select 0, %s10, %s8
  $region1: #{tpu_custom_call.1} parent=0
    #allocation2 [shape = 'u8[4096]{0}', space=vmem, size = 0x1000, scoped, tag = 'output window, operand 0, single buffered']
    #allocation3 [shape = 's32[1]{0}', space=sflag, size = 0x4, scoped, tag = 'scoped memory for tpu_custom_call.1']
    %12 = vsyncpa [#allocation3], 0
    // Predicated region
    $region2: #{tpu_custom_call.1} parent=1 // pred_check
      _
    $region3: #{tpu_custom_call.1} parent=1 // pred_check_branch
      %14 = sbr.rel (0) target = $region5
    $region4: #{tpu_custom_call.1} parent=1 // pred_region
      _
    $region5: #{tpu_custom_call.1} parent=1 // pred_fallthru
      _
    // Predicated region
    $region6: #{tpu_custom_call.1} parent=1 // pred_check
      _
    $region7: #{tpu_custom_call.1} parent=1 // pred_check_branch
      %16 = sbr.rel (0) target = $region9
    $region8: #{tpu_custom_call.1} parent=1 // pred_region
      _
    $region9: #{tpu_custom_call.1} parent=1 // pred_fallthru
      _
    // Predicated region
    $region10: #{tpu_custom_call.1} parent=1 // pred_check
      _
    $region11: #{tpu_custom_call.1} parent=1 // pred_check_branch
      %18 = sbr.rel (0) target = $region13
    $region12: #{tpu_custom_call.1} parent=1 // pred_region
      _
    $region13: #{tpu_custom_call.1} parent=1 // pred_fallthru
      _
    // Predicated region
    $region14: #{tpu_custom_call.1} parent=1 // pred_check
      _
    $region15: #{tpu_custom_call.1} parent=1 // pred_check_branch
      %20 = sbr.rel (0) target = $region17
    $region16: #{tpu_custom_call.1} parent=1 // pred_region
      _
    $region17: #{tpu_custom_call.1} parent=1 // pred_fallthru
      _
    // Predicated region
    $region18: #{tpu_custom_call.1} parent=1 // pred_check
      _
    $region19: #{tpu_custom_call.1} parent=1 // pred_check_branch
      %22 = sbr.rel (0) target = $region21
    $region20: #{tpu_custom_call.1} parent=1 // pred_region
      _
    $region21: #{tpu_custom_call.1} parent=1 // pred_fallthru
      _
    // Predicated region
    $region22: #{tpu_custom_call.1} parent=1 // pred_check
      _
    $region23: #{tpu_custom_call.1} parent=1 // pred_check_branch
      %24 = sbr.rel (0) target = $region25
    $region24: #{tpu_custom_call.1} parent=1 // pred_region
      _
    $region25: #{tpu_custom_call.1} parent=1 // pred_fallthru
      _
    // Predicated region
    $region26: #{tpu_custom_call.1} parent=1 // pred_check
      _
    $region27: #{tpu_custom_call.1} parent=1 // pred_check_branch
      %26 = sbr.rel (0) target = $region29
    $region28: #{tpu_custom_call.1} parent=1 // pred_region
      _
    $region29: #{tpu_custom_call.1} parent=1 // pred_fallthru
      _
    %v27 = vld [vmem:[%s0] sm:$0xff]
    %v28 = vld [vmem:[%s0 + $0x8] sm:$0xff]
    %v29 = vld [vmem:[%s1] sm:$0xff]
    %v30 = vld [vmem:[%s1 + $0x8] sm:$0xff]
    %v31 = vld [vmem:[%s1 + $0x10] sm:$0xff]
    %v32 = vld [vmem:[%s1 + $0x18] sm:$0xff]
    %v33 = vld [vmem:[%s2] sm:$0xff]
    %v34 = vld [vmem:[%s2 + $0x8] sm:$0xff]
    %v35 = vld [vmem:[%s2 + $0x10] sm:$0xff]
    %v36 = vld [vmem:[%s2 + $0x18] sm:$0xff]
    %38 = vset.pattern.permute.xlu0 0
    %39 = vperm.xlu0 %38, %v33
    %v40 = vpop.permute.xlu0 %39
    %43 = vset.pattern.permute.xlu0 0
    %44 = vperm.xlu0 %43, %v34
    %v45 = vpop.permute.xlu0 %44
    %48 = vset.pattern.permute.xlu0 0
    %49 = vperm.xlu0 %48, %v35
    %v50 = vpop.permute.xlu0 %49
    %53 = vset.pattern.permute.xlu0 0
    %54 = vperm.xlu0 %53, %v36
    %v55 = vpop.permute.xlu0 %54
    %vm57 = vcmask 130048
    %v59 = vsel %vm57, %v29, 0
    %v62 = vsel %vm57, %v30, 0
    %v65 = vsel %vm57, %v31, 0
    %v68 = vsel %vm57, %v32, 0
    %70 = vmatprep.subr.mxu0 0.0
    %71 = vmatpush1.msra.mxu0 %v27
    %72 = vmatprep.subr.mxu0 0.0
    %73 = vmatpush1.msra.mxu0 %v28
    %74 = vmatprep.subr.mxu0 0.0
    %75 = vmatpush1.msra.mxu0 0.0
    %76 = vmatprep.subr.mxu0 0.0
    %77 = vmatpush1.msra.mxu0 0.0
    %78 = vmatprep.subr.mxu0 0.0
    %79 = vmatpush1.msra.mxu0 0.0
    %80 = vmatprep.subr.mxu0 0.0
    %81 = vmatpush1.msra.mxu0 0.0
    %82 = vmatprep.subr.mxu0 0.0
    %83 = vmatpush1.msra.mxu0 0.0
    %84 = vmatprep.subr.mxu0 0.0
    %85 = vmatpush1.msra.mxu0 0.0
    %86 = vmatprep.subr.mxu0 0.0
    %87 = vmatpush1.msra.mxu0 0.0
    %88 = vmatprep.subr.mxu0 0.0
    %89 = vmatpush1.msra.mxu0 0.0
    %90 = vmatprep.subr.mxu0 0.0
    %91 = vmatpush1.msra.mxu0 0.0
    %92 = vmatprep.subr.mxu0 0.0
    %93 = vmatpush1.msra.mxu0 0.0
    %94 = vmatprep.subr.mxu0 0.0
    %95 = vmatpush1.msra.mxu0 0.0
    %96 = vmatprep.subr.mxu0 0.0
    %97 = vmatpush1.msra.mxu0 0.0
    %98 = vmatprep.subr.mxu0 0.0
    %99 = vmatpush1.msra.mxu0 0.0
    %100 = vmatprep.subr.mxu0 0.0
    %101 = vmatpush1.msra.mxu0 0.0
    %102 = vmatprep.subr.mxu0 0.0
    %103 = vmatpush1.msra.mxu0 0.0
    %104 = vmatprep.subr.mxu0 0.0
    %105 = vmatpush1.msra.mxu0 0.0
    %106 = vmatprep.subr.mxu0 0.0
    %107 = vmatpush1.msra.mxu0 0.0
    %108 = vmatprep.subr.mxu0 0.0
    %109 = vmatpush1.msra.mxu0 0.0
    %110 = vmatprep.subr.mxu0 0.0
    %111 = vmatpush1.msra.mxu0 0.0
    %112 = vmatprep.subr.mxu0 0.0
    %113 = vmatpush1.msra.mxu0 0.0
    %114 = vmatprep.subr.mxu0 0.0
    %115 = vmatpush1.msra.mxu0 0.0
    %116 = vmatprep.subr.mxu0 0.0
    %117 = vmatpush1.msra.mxu0 0.0
    %118 = vmatprep.subr.mxu0 0.0
    %119 = vmatpush1.msra.mxu0 0.0
    %120 = vmatprep.subr.mxu0 0.0
    %121 = vmatpush1.msra.mxu0 0.0
    %122 = vmatprep.subr.mxu0 0.0
    %123 = vmatpush1.msra.mxu0 0.0
    %124 = vmatprep.subr.mxu0 0.0
    %125 = vmatpush1.msra.mxu0 0.0
    %126 = vmatprep.subr.mxu0 0.0
    %127 = vmatpush1.msra.mxu0 0.0
    %128 = vmatprep.subr.mxu0 0.0
    %129 = vmatpush1.msra.mxu0 0.0
    %130 = vmatprep.subr.mxu0 0.0
    %131 = vmatpush1.msra.mxu0 0.0
    %132 = vmatprep.subr.mxu0 0.0
    %133 = vmatpush1.msra.mxu0 0.0
    %134 = vmatprep.mubr.f32.mxu0 0.0
    %135 = vmatmul.mubr.f32.gmra.mrb[0].mxu0 %v59
    %v136 = vpop.f32.mrb[0].mxu0
    %v137 = vadd.f32 %v40, %v136
    %v138 = vpop.f32.mrb[0].mxu0
    %139 = vmatprep.mubr.f32.mxu0 0.0
    %140 = vmatmul.mubr.f32.gmra.mrb[0].mxu0 %v62
    %v141 = vpop.f32.mrb[0].mxu0
    %v142 = vadd.f32 %v45, %v141
    %v143 = vpop.f32.mrb[0].mxu0
    %144 = vmatprep.mubr.f32.mxu0 0.0
    %145 = vmatmul.mubr.f32.gmra.mrb[0].mxu0 %v65
    %v146 = vpop.f32.mrb[0].mxu0
    %v147 = vadd.f32 %v50, %v146
    %v148 = vpop.f32.mrb[0].mxu0
    %149 = vmatprep.mubr.f32.mxu0 0.0
    %150 = vmatmul.mubr.f32.gmra.mrb[0].mxu0 %v68
    %v151 = vpop.f32.mrb[0].mxu0
    %v152 = vadd.f32 %v55, %v151
    %v153 = vpop.f32.mrb[0].mxu0
    %154 = vdwg.mxu0
    %v155 = vmax.f32 %v137, 0.0
    %v156 = vmax.f32 %v142, 0.0
    %v157 = vmax.f32 %v147, 0.0
    %v158 = vmax.f32 %v152, 0.0
    %v159 = vld [vmem:[%s3] sm:$0xff]
    %v160 = vld [vmem:[%s3 + $0x8] sm:$0xff]
    %v161 = vld [vmem:[%s3 + $0x10] sm:$0xff]
    %v162 = vld [vmem:[%s3 + $0x18] sm:$0xff]
    %v163 = vld [vmem:[%s4] sm:$0xff]
    %v164 = vld [vmem:[%s4 + $0x8] sm:$0xff]
    %v165 = vld [vmem:[%s4 + $0x10] sm:$0xff]
    %v166 = vld [vmem:[%s4 + $0x18] sm:$0xff]
    %168 = vset.pattern.permute.xlu0 0
    %169 = vperm.xlu0 %168, %v163
    %v170 = vpop.permute.xlu0 %169
    %173 = vset.pattern.permute.xlu0 0
    %174 = vperm.xlu0 %173, %v164
    %v175 = vpop.permute.xlu0 %174
    %178 = vset.pattern.permute.xlu0 0
    %179 = vperm.xlu0 %178, %v165
    %v180 = vpop.permute.xlu0 %179
    %183 = vset.pattern.permute.xlu0 0
    %184 = vperm.xlu0 %183, %v166
    %v185 = vpop.permute.xlu0 %184
    %vm187 = vcmask 261120
    %v189 = vsel %vm187, %v159, 0
    %v192 = vsel %vm187, %v160, 0
    %v195 = vsel %vm187, %v161, 0
    %v198 = vsel %vm187, %v162, 0
    %200 = vmatprep.subr.mxu0 0.0
    %201 = vmatpush1.msra.mxu0 %v155
    %202 = vmatprep.subr.mxu0 0.0
    %203 = vmatpush1.msra.mxu0 %v156
    %204 = vmatprep.subr.mxu0 0.0
    %205 = vmatpush1.msra.mxu0 %v157
    %206 = vmatprep.subr.mxu0 0.0
    %207 = vmatpush1.msra.mxu0 %v158
    %208 = vmatprep.subr.mxu0 0.0
    %209 = vmatpush1.msra.mxu0 0.0
    %210 = vmatprep.subr.mxu0 0.0
    %211 = vmatpush1.msra.mxu0 0.0
    %212 = vmatprep.subr.mxu0 0.0
    %213 = vmatpush1.msra.mxu0 0.0
    %214 = vmatprep.subr.mxu0 0.0
    %215 = vmatpush1.msra.mxu0 0.0
    %216 = vmatprep.subr.mxu0 0.0
    %217 = vmatpush1.msra.mxu0 0.0
    %218 = vmatprep.subr.mxu0 0.0
    %219 = vmatpush1.msra.mxu0 0.0
    %220 = vmatprep.subr.mxu0 0.0
    %221 = vmatpush1.msra.mxu0 0.0
    %222 = vmatprep.subr.mxu0 0.0
    %223 = vmatpush1.msra.mxu0 0.0
    %224 = vmatprep.subr.mxu0 0.0
    %225 = vmatpush1.msra.mxu0 0.0
    %226 = vmatprep.subr.mxu0 0.0
    %227 = vmatpush1.msra.mxu0 0.0
    %228 = vmatprep.subr.mxu0 0.0
    %229 = vmatpush1.msra.mxu0 0.0
    %230 = vmatprep.subr.mxu0 0.0
    %231 = vmatpush1.msra.mxu0 0.0
    %232 = vmatprep.subr.mxu0 0.0
    %233 = vmatpush1.msra.mxu0 0.0
    %234 = vmatprep.subr.mxu0 0.0
    %235 = vmatpush1.msra.mxu0 0.0
    %236 = vmatprep.subr.mxu0 0.0
    %237 = vmatpush1.msra.mxu0 0.0
    %238 = vmatprep.subr.mxu0 0.0
    %239 = vmatpush1.msra.mxu0 0.0
    %240 = vmatprep.subr.mxu0 0.0
    %241 = vmatpush1.msra.mxu0 0.0
    %242 = vmatprep.subr.mxu0 0.0
    %243 = vmatpush1.msra.mxu0 0.0
    %244 = vmatprep.subr.mxu0 0.0
    %245 = vmatpush1.msra.mxu0 0.0
    %246 = vmatprep.subr.mxu0 0.0
    %247 = vmatpush1.msra.mxu0 0.0
    %248 = vmatprep.subr.mxu0 0.0
    %249 = vmatpush1.msra.mxu0 0.0
    %250 = vmatprep.subr.mxu0 0.0
    %251 = vmatpush1.msra.mxu0 0.0
    %252 = vmatprep.subr.mxu0 0.0
    %253 = vmatpush1.msra.mxu0 0.0
    %254 = vmatprep.subr.mxu0 0.0
    %255 = vmatpush1.msra.mxu0 0.0
    %256 = vmatprep.subr.mxu0 0.0
    %257 = vmatpush1.msra.mxu0 0.0
    %258 = vmatprep.subr.mxu0 0.0
    %259 = vmatpush1.msra.mxu0 0.0
    %260 = vmatprep.subr.mxu0 0.0
    %261 = vmatpush1.msra.mxu0 0.0
    %262 = vmatprep.subr.mxu0 0.0
    %263 = vmatpush1.msra.mxu0 0.0
    %264 = vmatprep.mubr.f32.mxu0 0.0
    %265 = vmatmul.mubr.f32.gmra.mrb[0].mxu0 %v189
    %v266 = vpop.f32.mrb[0].mxu0
    %v267 = vadd.f32 %v170, %v266
    %v268 = vpop.f32.mrb[0].mxu0
    %269 = vmatprep.mubr.f32.mxu0 0.0
    %270 = vmatmul.mubr.f32.gmra.mrb[0].mxu0 %v192
    %v271 = vpop.f32.mrb[0].mxu0
    %v272 = vadd.f32 %v175, %v271
    %v273 = vpop.f32.mrb[0].mxu0
    %274 = vmatprep.mubr.f32.mxu0 0.0
    %275 = vmatmul.mubr.f32.gmra.mrb[0].mxu0 %v195
    %v276 = vpop.f32.mrb[0].mxu0
    %v277 = vadd.f32 %v180, %v276
    %v278 = vpop.f32.mrb[0].mxu0
    %279 = vmatprep.mubr.f32.mxu0 0.0
    %280 = vmatmul.mubr.f32.gmra.mrb[0].mxu0 %v198
    %v281 = vpop.f32.mrb[0].mxu0
    %v282 = vadd.f32 %v185, %v281
    %v283 = vpop.f32.mrb[0].mxu0
    %284 = vdwg.mxu0
    %v285 = vmax.f32 %v267, 0.0
    %v286 = vmax.f32 %v272, 0.0
    %v287 = vmax.f32 %v277, 0.0
    %v288 = vmax.f32 %v282, 0.0
    %v289 = vld [vmem:[%s5] sm:$0xff]
    %v290 = vld [vmem:[%s6] sm:$0xff]
    %292 = vset.pattern.permute.xlu0 0
    %293 = vperm.xlu0 %292, %v290
    %v294 = vpop.permute.xlu0 %293
    %v297 = vsel %vm187, %v289, 0
    %299 = vmatprep.subr.mxu0 0.0
    %300 = vmatpush1.msra.mxu0 %v285
    %301 = vmatprep.subr.mxu0 0.0
    %302 = vmatpush1.msra.mxu0 %v286
    %303 = vmatprep.subr.mxu0 0.0
    %304 = vmatpush1.msra.mxu0 %v287
    %305 = vmatprep.subr.mxu0 0.0
    %306 = vmatpush1.msra.mxu0 %v288
    %307 = vmatprep.subr.mxu0 0.0
    %308 = vmatpush1.msra.mxu0 0.0
    %309 = vmatprep.subr.mxu0 0.0
    %310 = vmatpush1.msra.mxu0 0.0
    %311 = vmatprep.subr.mxu0 0.0
    %312 = vmatpush1.msra.mxu0 0.0
    %313 = vmatprep.subr.mxu0 0.0
    %314 = vmatpush1.msra.mxu0 0.0
    %315 = vmatprep.subr.mxu0 0.0
    %316 = vmatpush1.msra.mxu0 0.0
    %317 = vmatprep.subr.mxu0 0.0
    %318 = vmatpush1.msra.mxu0 0.0
    %319 = vmatprep.subr.mxu0 0.0
    %320 = vmatpush1.msra.mxu0 0.0
    %321 = vmatprep.subr.mxu0 0.0
    %322 = vmatpush1.msra.mxu0 0.0
    %323 = vmatprep.subr.mxu0 0.0
    %324 = vmatpush1.msra.mxu0 0.0
    %325 = vmatprep.subr.mxu0 0.0
    %326 = vmatpush1.msra.mxu0 0.0
    %327 = vmatprep.subr.mxu0 0.0
    %328 = vmatpush1.msra.mxu0 0.0
    %329 = vmatprep.subr.mxu0 0.0
    %330 = vmatpush1.msra.mxu0 0.0
    %331 = vmatprep.subr.mxu0 0.0
    %332 = vmatpush1.msra.mxu0 0.0
    %333 = vmatprep.subr.mxu0 0.0
    %334 = vmatpush1.msra.mxu0 0.0
    %335 = vmatprep.subr.mxu0 0.0
    %336 = vmatpush1.msra.mxu0 0.0
    %337 = vmatprep.subr.mxu0 0.0
    %338 = vmatpush1.msra.mxu0 0.0
    %339 = vmatprep.subr.mxu0 0.0
    %340 = vmatpush1.msra.mxu0 0.0
    %341 = vmatprep.subr.mxu0 0.0
    %342 = vmatpush1.msra.mxu0 0.0
    %343 = vmatprep.subr.mxu0 0.0
    %344 = vmatpush1.msra.mxu0 0.0
    %345 = vmatprep.subr.mxu0 0.0
    %346 = vmatpush1.msra.mxu0 0.0
    %347 = vmatprep.subr.mxu0 0.0
    %348 = vmatpush1.msra.mxu0 0.0
    %349 = vmatprep.subr.mxu0 0.0
    %350 = vmatpush1.msra.mxu0 0.0
    %351 = vmatprep.subr.mxu0 0.0
    %352 = vmatpush1.msra.mxu0 0.0
    %353 = vmatprep.subr.mxu0 0.0
    %354 = vmatpush1.msra.mxu0 0.0
    %355 = vmatprep.subr.mxu0 0.0
    %356 = vmatpush1.msra.mxu0 0.0
    %357 = vmatprep.subr.mxu0 0.0
    %358 = vmatpush1.msra.mxu0 0.0
    %359 = vmatprep.subr.mxu0 0.0
    %360 = vmatpush1.msra.mxu0 0.0
    %361 = vmatprep.subr.mxu0 0.0
    %362 = vmatpush1.msra.mxu0 0.0
    %363 = vmatprep.mubr.f32.mxu0 0.0
    %364 = vmatmul.mubr.f32.gmra.mrb[0].mxu0 %v297
    %v365 = vpop.f32.mrb[0].mxu0
    %v366 = vadd.f32 %v294, %v365
    %v367 = vpop.f32.mrb[0].mxu0
    %368 = vdwg.mxu0
    %vm369 = vcmask 64512
    %v370 = vsel %vm369, %v366, -inf
    %v371 = vrot.slane %v370, 4
    %v372 = vmax.f32 %v370, %v371
    %v373 = vrot.slane %v372, 2
    %v374 = vmax.f32 %v372, %v373
    %v375 = vrot.slane %v374, 1
    %v376 = vmax.f32 %v374, %v375
    %v377 = vsub.f32 %v366, %v376
    %v378 = vmul.f32 %v377, 1.442695
    %v379 = vpow.pop %v378
    %v380 = vsel %vm369, %v379, 0.0
    %v381 = vrot.slane %v380, 4
    %v382 = vadd.f32 %v380, %v381
    %v383 = vrot.slane %v382, 2
    %v384 = vadd.f32 %v382, %v383
    %v385 = vrot.slane %v384, 1
    %v386 = vadd.f32 %v384, %v385
    %v387 = vrcp.pop %v386
    %v388 = vmul.f32 %v386, %v387
    %v389 = vsub.f32 2.0, %v388
    %v390 = vmul.f32 %v387, %v389
    %v391 = vmul.f32 %v379, %v390
    %392 = vst.msk [vmem:[#allocation2] sm:$0xff] %vm369, %v391
    // Predicated region
    $region30: #{tpu_custom_call.1} parent=1 // pred_check
      _
    $region31: #{tpu_custom_call.1} parent=1 // pred_check_branch
      %394 = sbr.rel (0) target = $region33
    $region32: #{tpu_custom_call.1} parent=1 // pred_region
      %s396 = ssub.s32 128, 128
      %397 = vsyncadd [#allocation3], %s396
      %s399 = sshll.u32 [#allocation2], 4
      %s400 = int_to_ptr.vmem [resolvable:$true] %s399
      %402 = dma.vmem_to_hbm [thread:$0]  %s400, 128, %s7, [#allocation3]
    $region33: #{tpu_custom_call.1} parent=1 // pred_fallthru
      _
    // Predicated region
    $region34: #{tpu_custom_call.1} parent=1 // pred_check
      _
    $region35: #{tpu_custom_call.1} parent=1 // pred_check_branch
      %404 = sbr.rel (0) target = $region37
    $region36: #{tpu_custom_call.1} parent=1 // pred_region
      %405 = dma.done [#allocation3], 128
    $region37: #{tpu_custom_call.1} parent=1 // pred_fallthru
      _
    %406 = vsyncpa [#allocation3], 1

</llo_original>
